<compile_context>
chip_gen: v5e
topology: v5e:2x2
jax: 0.10.0
libtpu: 0.0.40
codegen_flags: <defaults>
</compile_context>

<pallas_src>
import jax
import jax.numpy as jnp
from jax.experimental import pallas as pl
from jax.experimental.pallas import tpu as pltpu

IN_FEATURES = 13
HIDDEN1 = 64
HIDDEN2 = 32
OUT_FEATURES = 1

# Per grid step (tile_b = 4096): x block 13->16 sublanes x 4096 lanes f32
# = 256 KB (x2 buffers), h1 1 MB, h2 0.5 MB — far under every generation's
# scoped-VMEM default.  Boston-Housing batches (~500) never hit the grid path.
_MAX_TILE_B = 4096


def _mlp_kernel(xT_ref, w1_ref, b1_ref, w2_ref, b2_ref, w3_ref, b3_ref, o_ref):
    xT = xT_ref[...]                                            # (13, tile_b)
    # Layer 1: (64,13) @ (13,tile_b) + (64,1) -> ReLU            (MXU + VPU)
    h1 = jnp.dot(w1_ref[...], xT, preferred_element_type=jnp.float32)
    h1 = jnp.maximum(h1 + b1_ref[...], 0.0)                     # (64, tile_b)
    # Layer 2: (32,64) @ (64,tile_b) + (32,1) -> ReLU            (MXU + VPU)
    h2 = jnp.dot(w2_ref[...], h1, preferred_element_type=jnp.float32)
    h2 = jnp.maximum(h2 + b2_ref[...], 0.0)                     # (32, tile_b)
    # Layer 3: N=1 head -> lane-broadcast multiply + sublane reduce (VPU/XLU),
    # avoiding a degenerate 1-row MXU matmul.  Result is lane-dense (1, tile_b).
    out = jnp.sum(h2 * w3_ref[...], axis=0, keepdims=True) + b3_ref[...]
    o_ref[...] = out.astype(o_ref.dtype)


def prepare_params(w1, b1, w2, b2, w3, b3):
    """One-time repack of PyTorch-style (out,in)/(out,) params.

    Call OUTSIDE the jitted forward.  Weights stay (out,in) because the kernel
    computes feature-major W @ x; biases become (out,1) columns; the final-layer
    weight becomes a (32,1) column for the VPU/XLU reduce.
    """
    return (
        jnp.asarray(w1, jnp.float32),                              # (64, 13)
        jnp.asarray(b1, jnp.float32).reshape(HIDDEN1, 1),          # (64, 1)
        jnp.asarray(w2, jnp.float32),                              # (32, 64)
        jnp.asarray(b2, jnp.float32).reshape(HIDDEN2, 1),          # (32, 1)
        jnp.asarray(w3, jnp.float32).reshape(HIDDEN2, 1),          # (32, 1)
        jnp.asarray(b3, jnp.float32).reshape(OUT_FEATURES, 1),     # (1, 1)
    )


@jax.jit
def boston_housing_nn_forward(x, w1, b1c, w2, b2c, w3c, b3c):
    """Forward pass. x: (B, 13) float32. Returns (B, 1) float32."""
    B = x.shape[0]
    # Feature-major view: batch on the lane axis everywhere inside the kernel.
    x_t = jnp.asarray(x, jnp.float32).T                            # (13, B)

    if B <= _MAX_TILE_B:
        # Single full-extent block: no (8,128) divisibility constraint, no pad.
        tile_b, grid, b_pad = B, 1, B
    else:
        tile_b = _MAX_TILE_B
        grid = pl.cdiv(B, tile_b)
        b_pad = grid * tile_b
        x_t = jnp.pad(x_t, ((0, 0), (0, b_pad - B)))               # tail tile

    # Weights/biases: whole-array blocks, resident in VMEM across the grid.
    resident = lambda shape: pl.BlockSpec(shape, lambda i: (0,) * len(shape))

    out = pl.pallas_call(
        _mlp_kernel,
        out_shape=jax.ShapeDtypeStruct((OUT_FEATURES, b_pad), jnp.float32),
        grid=(grid,),
        in_specs=[
            pl.BlockSpec((IN_FEATURES, tile_b), lambda i: (0, i)),
            resident((HIDDEN1, IN_FEATURES)),
            resident((HIDDEN1, 1)),
            resident((HIDDEN2, HIDDEN1)),
            resident((HIDDEN2, 1)),
            resident((HIDDEN2, 1)),
            resident((OUT_FEATURES, 1)),
        ],
        out_specs=pl.BlockSpec((OUT_FEATURES, tile_b), lambda i: (0, i)),
        compiler_params=pltpu.CompilerParams(
            dimension_semantics=("parallel",)),   # shard batch across TCs on v7x
    )(x_t, w1, b1c, w2, b2c, w3c, b3c)

    # (1, b_pad) lane-dense slab -> (B, 1) module-shaped output.
    return out[:, :B].reshape(B, OUT_FEATURES)


def _init_linear(key, out_f, in_f):
    """Deterministic init mimicking PyTorch nn.Linear default (uniform +-1/sqrt(fan_in))."""
    kw, kb = jax.random.split(key)
    bound = 1.0 / jnp.sqrt(jnp.float32(in_f))
    w = jax.random.uniform(kw, (out_f, in_f), jnp.float32, -bound, bound)
    b = jax.random.uniform(kb, (out_f,), jnp.float32, -bound, bound)
    return w, b


def _reference_forward(x, w1, b1, w2, b2, w3, b3):
    h1 = jnp.maximum(x @ w1.T + b1, 0.0)
    h2 = jnp.maximum(h1 @ w2.T + b2, 0.0)
    return h2 @ w3.T + b3


if __name__ == "__main__":
    key = jax.random.PRNGKey(0)
    kx, k1, k2, k3 = jax.random.split(key, 4)

    # PyTorch-style params (out, in) / (out,)
    w1, b1 = _init_linear(k1, HIDDEN1, IN_FEATURES)
    w2, b2 = _init_linear(k2, HIDDEN2, HIDDEN1)
    w3, b3 = _init_linear(k3, OUT_FEATURES, HIDDEN2)
    params = prepare_params(w1, b1, w2, b2, w3, b3)

    # Small batch
    batch = 8
    x = jax.random.normal(kx, (batch, IN_FEATURES), jnp.float32)
    out = jax.block_until_ready(boston_housing_nn_forward(x, *params))
    ref = _reference_forward(x, w1, b1, w2, b2, w3, b3)
    assert out.shape == (batch, OUT_FEATURES), out.shape
    assert jnp.allclose(out, ref, atol=1e-5, rtol=1e-5), "mismatch vs. JAX reference (small)"

    # Boston-Housing-scale batch, not a multiple of 8/128 (odd lane extent)
    batch2 = 509
    x2 = jax.random.normal(kx, (batch2, IN_FEATURES), jnp.float32)
    out2 = jax.block_until_ready(boston_housing_nn_forward(x2, *params))
    ref2 = _reference_forward(x2, w1, b1, w2, b2, w3, b3)
    assert out2.shape == (batch2, OUT_FEATURES), out2.shape
    assert jnp.allclose(out2, ref2, atol=1e-5, rtol=1e-5), "mismatch vs. JAX reference (509)"

    print("KERNEL_OK")
</pallas_src>

<mosaic_0001>
module attributes {stable_mosaic.version = 11 : i64} {
  func.func @_mlp_kernel(%arg0: i32, %arg1: memref<13x8xf32, #tpu.memory_space<vmem>>, %arg2: memref<64x13xf32, #tpu.memory_space<vmem>>, %arg3: memref<64x1xf32, #tpu.memory_space<vmem>>, %arg4: memref<32x64xf32, #tpu.memory_space<vmem>>, %arg5: memref<32x1xf32, #tpu.memory_space<vmem>>, %arg6: memref<32x1xf32, #tpu.memory_space<vmem>>, %arg7: memref<1x1xf32, #tpu.memory_space<vmem>>, %arg8: memref<1x8xf32, #tpu.memory_space<vmem>>) attributes {dimension_semantics = [#tpu.dimension_semantics<parallel>], iteration_bounds = array<i64: 1>, scalar_prefetch = 0 : i64, scratch_operands = 0 : i64, tpu.core_type = #tpu.core_type<tc>, window_params = [{transform_indices = @transform_0, window_bounds = array<i64: 13, 8>}, {pipeline_mode = #tpu.pipeline_mode<synchronous>, transform_indices = @transform_1, window_bounds = array<i64: 64, 13>}, {pipeline_mode = #tpu.pipeline_mode<synchronous>, transform_indices = @transform_2, window_bounds = array<i64: 64, 1>}, {pipeline_mode = #tpu.pipeline_mode<synchronous>, transform_indices = @transform_3, window_bounds = array<i64: 32, 64>}, {pipeline_mode = #tpu.pipeline_mode<synchronous>, transform_indices = @transform_4, window_bounds = array<i64: 32, 1>}, {pipeline_mode = #tpu.pipeline_mode<synchronous>, transform_indices = @transform_5, window_bounds = array<i64: 32, 1>}, {pipeline_mode = #tpu.pipeline_mode<synchronous>, transform_indices = @transform_6, window_bounds = array<i64: 1, 1>}, {transform_indices = @transform_7, window_bounds = array<i64: 1, 8>}]} {
    %c0 = arith.constant 0 : index
    %c0_0 = arith.constant 0 : index
    %0 = vector.load %arg1[%c0, %c0_0] : memref<13x8xf32, #tpu.memory_space<vmem>>, vector<13x8xf32>
    %c0_1 = arith.constant 0 : index
    %c0_2 = arith.constant 0 : index
    %1 = vector.load %arg2[%c0_1, %c0_2] : memref<64x13xf32, #tpu.memory_space<vmem>>, vector<64x13xf32>
    %cst = arith.constant dense<0.000000e+00> : vector<64x8xf32>
    %2 = tpu.matmul %1, %0, %cst {dimension_numbers = #tpu.dot_dimension_numbers<[1], [0], [0], [1], [0, 0, 1, 1], [], []>} : vector<64x13xf32>, vector<13x8xf32>, vector<64x8xf32> -> vector<64x8xf32>
    %c0_3 = arith.constant 0 : index
    %c0_4 = arith.constant 0 : index
    %3 = vector.load %arg3[%c0_3, %c0_4] : memref<64x1xf32, #tpu.memory_space<vmem>>, vector<64x1xf32>
    %4 = vector.broadcast %3 : vector<64x1xf32> to vector<64x8xf32>
    %5 = arith.addf %2, %4 : vector<64x8xf32>
    %cst_5 = arith.constant 0.000000e+00 : f32
    %6 = vector.broadcast %cst_5 : f32 to vector<64x8xf32>
    %7 = arith.maximumf %5, %6 : vector<64x8xf32>
    %c0_6 = arith.constant 0 : index
    %c0_7 = arith.constant 0 : index
    %8 = vector.load %arg4[%c0_6, %c0_7] : memref<32x64xf32, #tpu.memory_space<vmem>>, vector<32x64xf32>
    %cst_8 = arith.constant dense<0.000000e+00> : vector<32x8xf32>
    %9 = tpu.matmul %8, %7, %cst_8 {dimension_numbers = #tpu.dot_dimension_numbers<[1], [0], [0], [1], [0, 0, 1, 1], [], []>} : vector<32x64xf32>, vector<64x8xf32>, vector<32x8xf32> -> vector<32x8xf32>
    %c0_9 = arith.constant 0 : index
    %c0_10 = arith.constant 0 : index
    %10 = vector.load %arg5[%c0_9, %c0_10] : memref<32x1xf32, #tpu.memory_space<vmem>>, vector<32x1xf32>
    %11 = vector.broadcast %10 : vector<32x1xf32> to vector<32x8xf32>
    %12 = arith.addf %9, %11 : vector<32x8xf32>
    %cst_11 = arith.constant 0.000000e+00 : f32
    %13 = vector.broadcast %cst_11 : f32 to vector<32x8xf32>
    %14 = arith.maximumf %12, %13 : vector<32x8xf32>
    %c0_12 = arith.constant 0 : index
    %c0_13 = arith.constant 0 : index
    %15 = vector.load %arg6[%c0_12, %c0_13] : memref<32x1xf32, #tpu.memory_space<vmem>>, vector<32x1xf32>
    %16 = vector.broadcast %15 : vector<32x1xf32> to vector<32x8xf32>
    %17 = arith.mulf %14, %16 : vector<32x8xf32>
    %cst_14 = arith.constant dense<0.000000e+00> : vector<8xf32>
    %18 = vector.multi_reduction <add>, %17, %cst_14 [0] : vector<32x8xf32> to vector<8xf32>
    %19 = vector.shape_cast %18 : vector<8xf32> to vector<1x8xf32>
    %c0_15 = arith.constant 0 : index
    %c0_16 = arith.constant 0 : index
    %20 = vector.load %arg7[%c0_15, %c0_16] : memref<1x1xf32, #tpu.memory_space<vmem>>, vector<1x1xf32>
    %21 = vector.broadcast %20 : vector<1x1xf32> to vector<1x8xf32>
    %22 = arith.addf %19, %21 : vector<1x8xf32>
    %c0_17 = arith.constant 0 : index
    %c0_18 = arith.constant 0 : index
    %23 = vector.load %arg8[%c0_17, %c0_18] : memref<1x8xf32, #tpu.memory_space<vmem>>, vector<1x8xf32>
    tpu.vector_store %arg8[%c0_17, %c0_18], %22 {strides = array<i32>} : memref<1x8xf32, #tpu.memory_space<vmem>>, vector<1x8xf32>,
    return
  }
  func.func @transform_0(%arg0: i32) -> (i32, i32) {
    %c0_i32 = arith.constant 0 : i32
    %c0_i32_0 = arith.constant 0 : i32
    return %c0_i32, %arg0 : i32, i32
  }
  func.func @transform_1(%arg0: i32) -> (i32, i32) {
    %c0_i32 = arith.constant 0 : i32
    %c0_i32_0 = arith.constant 0 : i32
    %c0_i32_1 = arith.constant 0 : i32
    return %c0_i32, %c0_i32_0 : i32, i32
  }
  func.func @transform_2(%arg0: i32) -> (i32, i32) {
    %c0_i32 = arith.constant 0 : i32
    %c0_i32_0 = arith.constant 0 : i32
    %c0_i32_1 = arith.constant 0 : i32
    return %c0_i32, %c0_i32_0 : i32, i32
  }
  func.func @transform_3(%arg0: i32) -> (i32, i32) {
    %c0_i32 = arith.constant 0 : i32
    %c0_i32_0 = arith.constant 0 : i32
    %c0_i32_1 = arith.constant 0 : i32
    return %c0_i32, %c0_i32_0 : i32, i32
  }
  func.func @transform_4(%arg0: i32) -> (i32, i32) {
    %c0_i32 = arith.constant 0 : i32
    %c0_i32_0 = arith.constant 0 : i32
    %c0_i32_1 = arith.constant 0 : i32
    return %c0_i32, %c0_i32_0 : i32, i32
  }
  func.func @transform_5(%arg0: i32) -> (i32, i32) {
    %c0_i32 = arith.constant 0 : i32
    %c0_i32_0 = arith.constant 0 : i32
    %c0_i32_1 = arith.constant 0 : i32
    return %c0_i32, %c0_i32_0 : i32, i32
  }
  func.func @transform_6(%arg0: i32) -> (i32, i32) {
    %c0_i32 = arith.constant 0 : i32
    %c0_i32_0 = arith.constant 0 : i32
    %c0_i32_1 = arith.constant 0 : i32
    return %c0_i32, %c0_i32_0 : i32, i32
  }
  func.func @transform_7(%arg0: i32) -> (i32, i32) {
    %c0_i32 = arith.constant 0 : i32
    %c0_i32_0 = arith.constant 0 : i32
    return %c0_i32, %arg0 : i32, i32
  }
}

</mosaic_0001>

<llo_original>
// kernel: boston_housing_nn_forward.1
$region0: #{boston_housing_nn_forward.1}
  #allocation0 [shape = 'u32[]', space=smem, size = 0x4, offset = 0x4, fixed_abs, tag = 'smem constant byte address 0x4 - core index']
  #allocation1 [shape = 'u32[72,128]{1,0:T(1,128)}', space=vmem, size = 0x9000, scoped, tag = 'internal scratch']
  #allocation2 [shape = 'f32[1,1]{1,0:T(1,128)S(1)}', space=vmem, size = 0x200, scoped, tag = 'scoped memory for boston_housing_nn_forward.1']
  %s0 = inlined_call_operand.vmem [shape: f32[13,8], index: 0, kind: input, shape index: {}]
  %s1 = inlined_call_operand.vmem [shape: f32[64,13], index: 1, kind: input, shape index: {}]
  %s2 = inlined_call_operand.vmem [shape: f32[64,1], index: 2, kind: input, shape index: {}]
  %s3 = inlined_call_operand.vmem [shape: f32[32,64], index: 3, kind: input, shape index: {}]
  %s4 = inlined_call_operand.vmem [shape: f32[32,1], index: 4, kind: input, shape index: {}]
  %s5 = inlined_call_operand.vmem [shape: f32[32,1], index: 5, kind: input, shape index: {}]
  %s6 = inlined_call_operand.<no memory space> [shape: f32[1,1], index: 6, kind: input, shape index: {}]
  %s7 = inlined_call_operand.hbm [shape: f32[1,8], index: 7, kind: output, shape index: {}]
  %s8 = sld [smem:[#allocation0]]
  $region38: #{boston_housing_nn_forward.1} parent=0
    _
  %s10 = ssub.s32 1, %s8
  %s11 = scalar_select 0, %s10, %s8
  %v12 = vstv %s6
  %13 = vst [vmem:[#allocation2] sm:$0x1] %v12
  $region1: #{boston_housing_nn_forward.1} parent=0
    #allocation3 [shape = 'u8[512]{0}', space=vmem, size = 0x400, scoped, tag = 'output window, operand 0, single buffered']
    #allocation4 [shape = 's32[1]{0}', space=sflag, size = 0x4, scoped, tag = 'scoped memory for boston_housing_nn_forward.1']
    %14 = vsyncpa [#allocation4], 0
    // Predicated region
    $region2: #{boston_housing_nn_forward.1} parent=1 // pred_check
      _
    $region3: #{boston_housing_nn_forward.1} parent=1 // pred_check_branch
      %16 = sbr.rel (0) target = $region5
    $region4: #{boston_housing_nn_forward.1} parent=1 // pred_region
      _
    $region5: #{boston_housing_nn_forward.1} parent=1 // pred_fallthru
      _
    // Predicated region
    $region6: #{boston_housing_nn_forward.1} parent=1 // pred_check
      _
    $region7: #{boston_housing_nn_forward.1} parent=1 // pred_check_branch
      %18 = sbr.rel (0) target = $region9
    $region8: #{boston_housing_nn_forward.1} parent=1 // pred_region
      _
    $region9: #{boston_housing_nn_forward.1} parent=1 // pred_fallthru
      _
    // Predicated region
    $region10: #{boston_housing_nn_forward.1} parent=1 // pred_check
      _
    $region11: #{boston_housing_nn_forward.1} parent=1 // pred_check_branch
      %20 = sbr.rel (0) target = $region13
    $region12: #{boston_housing_nn_forward.1} parent=1 // pred_region
      _
    $region13: #{boston_housing_nn_forward.1} parent=1 // pred_fallthru
      _
    // Predicated region
    $region14: #{boston_housing_nn_forward.1} parent=1 // pred_check
      _
    $region15: #{boston_housing_nn_forward.1} parent=1 // pred_check_branch
      %22 = sbr.rel (0) target = $region17
    $region16: #{boston_housing_nn_forward.1} parent=1 // pred_region
      _
    $region17: #{boston_housing_nn_forward.1} parent=1 // pred_fallthru
      _
    // Predicated region
    $region18: #{boston_housing_nn_forward.1} parent=1 // pred_check
      _
    $region19: #{boston_housing_nn_forward.1} parent=1 // pred_check_branch
      %24 = sbr.rel (0) target = $region21
    $region20: #{boston_housing_nn_forward.1} parent=1 // pred_region
      _
    $region21: #{boston_housing_nn_forward.1} parent=1 // pred_fallthru
      _
    // Predicated region
    $region22: #{boston_housing_nn_forward.1} parent=1 // pred_check
      _
    $region23: #{boston_housing_nn_forward.1} parent=1 // pred_check_branch
      %26 = sbr.rel (0) target = $region25
    $region24: #{boston_housing_nn_forward.1} parent=1 // pred_region
      _
    $region25: #{boston_housing_nn_forward.1} parent=1 // pred_fallthru
      _
    // Predicated region
    $region26: #{boston_housing_nn_forward.1} parent=1 // pred_check
      _
    $region27: #{boston_housing_nn_forward.1} parent=1 // pred_check_branch
      %28 = sbr.rel (0) target = $region29
    $region28: #{boston_housing_nn_forward.1} parent=1 // pred_region
      _
    $region29: #{boston_housing_nn_forward.1} parent=1 // pred_fallthru
      _
    %v29 = vld [vmem:[%s0] sm:$0xff]
    %v30 = vld [vmem:[%s0 + $0x8] sm:$0x1f]
    %v31 = vld [vmem:[%s1] sm:$0xff]
    %v32 = vld [vmem:[%s1 + $0x8] sm:$0xff]
    %v33 = vld [vmem:[%s1 + $0x10] sm:$0xff]
    %v34 = vld [vmem:[%s1 + $0x18] sm:$0xff]
    %v35 = vld [vmem:[%s1 + $0x20] sm:$0xff]
    %v36 = vld [vmem:[%s1 + $0x28] sm:$0xff]
    %v37 = vld [vmem:[%s1 + $0x30] sm:$0xff]
    %v38 = vld [vmem:[%s1 + $0x38] sm:$0xff]
    %v39 = vld [vmem:[%s2] sm:$0xff]
    %v40 = vld [vmem:[%s2 + $0x8] sm:$0xff]
    %v41 = vld [vmem:[%s2 + $0x10] sm:$0xff]
    %v42 = vld [vmem:[%s2 + $0x18] sm:$0xff]
    %v43 = vld [vmem:[%s2 + $0x20] sm:$0xff]
    %v44 = vld [vmem:[%s2 + $0x28] sm:$0xff]
    %v45 = vld [vmem:[%s2 + $0x30] sm:$0xff]
    %v46 = vld [vmem:[%s2 + $0x38] sm:$0xff]
    %48 = vset.pattern.permute.xlu0 0
    %49 = vperm.xlu0 %48, %v39
    %v50 = vpop.permute.xlu0 %49
    %53 = vset.pattern.permute.xlu0 0
    %54 = vperm.xlu0 %53, %v40
    %v55 = vpop.permute.xlu0 %54
    %58 = vset.pattern.permute.xlu0 0
    %59 = vperm.xlu0 %58, %v41
    %v60 = vpop.permute.xlu0 %59
    %63 = vset.pattern.permute.xlu0 0
    %64 = vperm.xlu0 %63, %v42
    %v65 = vpop.permute.xlu0 %64
    %68 = vset.pattern.permute.xlu0 0
    %69 = vperm.xlu0 %68, %v43
    %v70 = vpop.permute.xlu0 %69
    %73 = vset.pattern.permute.xlu0 0
    %74 = vperm.xlu0 %73, %v44
    %v75 = vpop.permute.xlu0 %74
    %78 = vset.pattern.permute.xlu0 0
    %79 = vperm.xlu0 %78, %v45
    %v80 = vpop.permute.xlu0 %79
    %83 = vset.pattern.permute.xlu0 0
    %84 = vperm.xlu0 %83, %v46
    %v85 = vpop.permute.xlu0 %84
    %vm87 = vcmask 105472
    %v89 = vsel %vm87, %v31, 0
    %v92 = vsel %vm87, %v32, 0
    %v95 = vsel %vm87, %v33, 0
    %v98 = vsel %vm87, %v34, 0
    %v101 = vsel %vm87, %v35, 0
    %v104 = vsel %vm87, %v36, 0
    %v107 = vsel %vm87, %v37, 0
    %v110 = vsel %vm87, %v38, 0
    %vm112 = vcmask 1044480
    %v114 = vsel %vm112, %v30, 0
    %116 = vmatpush.msra.mxu0 0.0
    %117 = vmatpush.msra.mxu0 0.0
    %118 = vmatpush.msra.mxu0 0.0
    %119 = vmatpush.msra.mxu0 0.0
    %120 = vmatpush.msra.mxu0 0.0
    %121 = vmatpush.msra.mxu0 0.0
    %122 = vmatpush.msra.mxu0 0.0
    %123 = vmatpush.msra.mxu0 0.0
    %124 = vmatpush.msra.mxu0 0.0
    %125 = vmatpush.msra.mxu0 0.0
    %126 = vmatpush.msra.mxu0 0.0
    %127 = vmatpush.msra.mxu0 0.0
    %128 = vmatpush.msra.mxu0 0.0
    %129 = vmatpush.msra.mxu0 0.0
    %130 = vmatpush.msra.mxu0 %v114
    %131 = vmatpush.msra.mxu0 %v29
    %132 = vmatmul.f32.gmra.mxu0 %v89
    %v133 = vpop.f32.mrf.mxu0
    %v134 = vadd.f32 %v50, %v133
    %135 = vmatmul.f32.gmra.mxu0 %v92
    %v136 = vpop.f32.mrf.mxu0
    %v137 = vadd.f32 %v55, %v136
    %138 = vmatmul.f32.gmra.mxu0 %v95
    %v139 = vpop.f32.mrf.mxu0
    %v140 = vadd.f32 %v60, %v139
    %141 = vmatmul.f32.gmra.mxu0 %v98
    %v142 = vpop.f32.mrf.mxu0
    %v143 = vadd.f32 %v65, %v142
    %144 = vmatmul.f32.gmra.mxu0 %v101
    %v145 = vpop.f32.mrf.mxu0
    %v146 = vadd.f32 %v70, %v145
    %147 = vmatmul.f32.gmra.mxu0 %v104
    %v148 = vpop.f32.mrf.mxu0
    %v149 = vadd.f32 %v75, %v148
    %150 = vmatmul.f32.gmra.mxu0 %v107
    %v151 = vpop.f32.mrf.mxu0
    %v152 = vadd.f32 %v80, %v151
    %153 = vmatmul.f32.gmra.mxu0 %v110
    %v154 = vpop.f32.mrf.mxu0
    %v155 = vadd.f32 %v85, %v154
    %156 = vdwg.mxu0
    %v157 = vmax.f32 %v134, 0.0
    %v158 = vmax.f32 %v137, 0.0
    %v159 = vmax.f32 %v140, 0.0
    %v160 = vmax.f32 %v143, 0.0
    %v161 = vmax.f32 %v146, 0.0
    %v162 = vmax.f32 %v149, 0.0
    %v163 = vmax.f32 %v152, 0.0
    %v164 = vmax.f32 %v155, 0.0
    %v165 = vld [vmem:[%s3] sm:$0xff]
    %v166 = vld [vmem:[%s3 + $0x8] sm:$0xff]
    %v167 = vld [vmem:[%s3 + $0x10] sm:$0xff]
    %v168 = vld [vmem:[%s3 + $0x18] sm:$0xff]
    %v169 = vld [vmem:[%s4] sm:$0xff]
    %v170 = vld [vmem:[%s4 + $0x8] sm:$0xff]
    %v171 = vld [vmem:[%s4 + $0x10] sm:$0xff]
    %v172 = vld [vmem:[%s4 + $0x18] sm:$0xff]
    %174 = vset.pattern.permute.xlu0 0
    %175 = vperm.xlu0 %174, %v169
    %v176 = vpop.permute.xlu0 %175
    %179 = vset.pattern.permute.xlu0 0
    %180 = vperm.xlu0 %179, %v170
    %v181 = vpop.permute.xlu0 %180
    %184 = vset.pattern.permute.xlu0 0
    %185 = vperm.xlu0 %184, %v171
    %v186 = vpop.permute.xlu0 %185
    %189 = vset.pattern.permute.xlu0 0
    %190 = vperm.xlu0 %189, %v172
    %v191 = vpop.permute.xlu0 %190
    %vm193 = vcmask 523264
    %v195 = vsel %vm193, %v165, 0
    %v198 = vsel %vm193, %v166, 0
    %v201 = vsel %vm193, %v167, 0
    %v204 = vsel %vm193, %v168, 0
    %206 = vmatpush.msra.mxu0 0.0
    %207 = vmatpush.msra.mxu0 0.0
    %208 = vmatpush.msra.mxu0 0.0
    %209 = vmatpush.msra.mxu0 0.0
    %210 = vmatpush.msra.mxu0 0.0
    %211 = vmatpush.msra.mxu0 0.0
    %212 = vmatpush.msra.mxu0 0.0
    %213 = vmatpush.msra.mxu0 0.0
    %214 = vmatpush.msra.mxu0 %v164
    %215 = vmatpush.msra.mxu0 %v163
    %216 = vmatpush.msra.mxu0 %v162
    %217 = vmatpush.msra.mxu0 %v161
    %218 = vmatpush.msra.mxu0 %v160
    %219 = vmatpush.msra.mxu0 %v159
    %220 = vmatpush.msra.mxu0 %v158
    %221 = vmatpush.msra.mxu0 %v157
    %222 = vmatmul.f32.gmra.mxu0 %v195
    %v223 = vpop.f32.mrf.mxu0
    %v224 = vadd.f32 %v176, %v223
    %225 = vmatmul.f32.gmra.mxu0 %v198
    %v226 = vpop.f32.mrf.mxu0
    %v227 = vadd.f32 %v181, %v226
    %228 = vmatmul.f32.gmra.mxu0 %v201
    %v229 = vpop.f32.mrf.mxu0
    %v230 = vadd.f32 %v186, %v229
    %231 = vmatmul.f32.gmra.mxu0 %v204
    %v232 = vpop.f32.mrf.mxu0
    %v233 = vadd.f32 %v191, %v232
    %234 = vdwg.mxu0
    %v235 = vmax.f32 %v224, 0.0
    %v236 = vmax.f32 %v227, 0.0
    %v237 = vmax.f32 %v230, 0.0
    %v238 = vmax.f32 %v233, 0.0
    %v239 = vld [vmem:[%s5] sm:$0xff]
    %v240 = vld [vmem:[%s5 + $0x8] sm:$0xff]
    %v241 = vld [vmem:[%s5 + $0x10] sm:$0xff]
    %v242 = vld [vmem:[%s5 + $0x18] sm:$0xff]
    %244 = vset.pattern.permute.xlu0 0
    %245 = vperm.xlu0 %244, %v239
    %v246 = vpop.permute.xlu0 %245
    %249 = vset.pattern.permute.xlu0 0
    %250 = vperm.xlu0 %249, %v240
    %v251 = vpop.permute.xlu0 %250
    %254 = vset.pattern.permute.xlu0 0
    %255 = vperm.xlu0 %254, %v241
    %v256 = vpop.permute.xlu0 %255
    %259 = vset.pattern.permute.xlu0 0
    %260 = vperm.xlu0 %259, %v242
    %v261 = vpop.permute.xlu0 %260
    %v263 = vmul.f32 %v235, %v246
    %v264 = vmul.f32 %v236, %v251
    %v265 = vmul.f32 %v237, %v256
    %v266 = vmul.f32 %v238, %v261
    %vm267 = vcmask 64512
    %v268 = vsel %vm267, %v263, 0.0
    %v269 = vsel %vm267, %v264, 0.0
    %v270 = vadd.f32 %v268, %v269
    %v271 = vsel %vm267, %v265, 0.0
    %v272 = vadd.f32 %v270, %v271
    %v273 = vsel %vm267, %v266, 0.0
    %v274 = vadd.f32 %v272, %v273
    %v275 = vrot.slane %v274, 4
    %v276 = vadd.f32 %v274, %v275
    %v277 = vrot.slane %v276, 2
    %v278 = vadd.f32 %v276, %v277
    %v279 = vrot.slane %v278, 1
    %v280 = vadd.f32 %v278, %v279
    %v281 = vld [vmem:[#allocation2] sm:$0x1]
    %283 = vset.pattern.permute.xlu0 0
    %284 = vperm.xlu0 %283, %v281
    %v285 = vpop.permute.xlu0 %284
    %v287 = vperm.slane %v285, 0
    %v288 = vadd.f32 %v280, %v287
    %vm289 = vcmask 57344
    %290 = vst.msk [vmem:[#allocation3] sm:$0x1] %vm289, %v288
    // Predicated region
    $region30: #{boston_housing_nn_forward.1} parent=1 // pred_check
      _
    $region31: #{boston_housing_nn_forward.1} parent=1 // pred_check_branch
      %292 = sbr.rel (0) target = $region33
    $region32: #{boston_housing_nn_forward.1} parent=1 // pred_region
      %294 = vsyncadd [#allocation4], 0
      %s296 = sshll.u32 [#allocation3], 4
      %s297 = int_to_ptr.vmem [resolvable:$true] %s296
      %s298 = sshll.u32 %s7, 4
      %s299 = int_to_ptr.hbm [resolvable:$true] %s298
      %301 = dma.vmem_to_hbm [thread:$0]  %s297, 16, %s299, [#allocation4]
    $region33: #{boston_housing_nn_forward.1} parent=1 // pred_fallthru
      _
    // Predicated region
    $region34: #{boston_housing_nn_forward.1} parent=1 // pred_check
      _
    $region35: #{boston_housing_nn_forward.1} parent=1 // pred_check_branch
      %303 = sbr.rel (0) target = $region37
    $region36: #{boston_housing_nn_forward.1} parent=1 // pred_region
      %305 = dma.done [#allocation4], 16
    $region37: #{boston_housing_nn_forward.1} parent=1 // pred_fallthru
      _
    %306 = vsyncpa [#allocation4], 1

</llo_original>
